<compile_context>
chip_gen: v7x
topology: tpu7x:2x2x1
jax: 0.10.0
libtpu: 0.0.40
codegen_flags: <defaults>
</compile_context>

<pallas_src>
import numpy as np
import jax
import jax.numpy as jnp
from jax import lax
from jax.experimental import pallas as pl
from jax.experimental.pallas import tpu as pltpu

SMOOTH = 0.001
LANE = 128
SUB = 8          # f32 sublanes per vreg
SUBROWS = 256    # inner compute sub-tile rows; multiple of 32 (int8/bf16/f32 safe)


def _round_up(x, m):
    return ((x + m - 1) // m) * m


def _tpu_vmem_bytes():
    try:
        return int(pltpu.get_tpu_info().vmem_capacity_bytes)
    except Exception:
        return 64 * 1024 * 1024        # conservative: v7x per-TensorCore VMEM


def _make_kernel(C, r_chunk, subrows, n_sub, rows_valid, ragged):
    nstat = 3 * C + 1
    assert subrows % SUB == 0
    groups = subrows // SUB

    def fold(plane):
        # (subrows, 128) -> (8, 128): tile-aligned reshape + leading-axis sum
        # -> pure vreg adds on the VPU (no cross-lane XLU work per chunk).
        return jnp.sum(plane.reshape(groups, SUB, LANE), axis=0)

    def kernel(x_ref, t_ref, out_ref, acc_ref):
        # x_ref  : (1, C, r_chunk, 128)   logits (f32 or bf16)
        # t_ref  : (1, r_chunk, 128)      int targets (int8/int32), -1 = padding
        # out_ref: (1, nstat, 128)        per-sample lane partials
        # acc_ref: (nstat, 8, 128) f32    per-sample sublane/lane accumulators
        k = pl.program_id(1)

        @pl.when(k == 0)
        def _init():
            acc_ref[...] = jnp.zeros_like(acc_ref)

        def subtile(i, masked):
            # Hoisted loads + f32 casts: each channel plane touched exactly once.
            if n_sub == 1:
                r0 = 0
                tgt = t_ref[0].astype(jnp.int32)
                xs = [x_ref[0, c].astype(jnp.float32) for c in range(C)]
            else:
                r0 = pl.multiple_of(i * subrows, subrows)
                tgt = t_ref[0, pl.ds(r0, subrows), :].astype(jnp.int32)
                xs = [x_ref[0, c, pl.ds(r0, subrows), :].astype(jnp.float32)
                      for c in range(C)]
            if masked:
                # Ragged tail chunk: rows beyond `rows_valid` contain
                # unspecified data (partial last block).  Mask by global row
                # index so garbage (possibly NaN) never reaches the
                # accumulators.  Only emitted for the last chunk.
                row_ids = lax.broadcasted_iota(jnp.int32, (subrows, LANE), 0)
                in_bounds = (k * r_chunk + r0 + row_ids) < rows_valid
                tgt = jnp.where(in_bounds, tgt, -1)
                xs = [jnp.where(in_bounds, x, 0.0) for x in xs]

            valid = tgt >= 0

            # channel-wise max / exp / sum, statically unrolled (C is 2 or 5)
            m = xs[0]
            for c in range(1, C):
                m = jnp.maximum(m, xs[c])
            ezs = [jnp.exp(xs[c] - m) for c in range(C)]
            s = ezs[0]
            for c in range(1, C):
                s = s + ezs[c]

            # softmax reciprocal on the (otherwise idle) EUP slot
            inv_s = jnp.where(valid, pl.reciprocal(s, approx=True), 0.0)
            # CE via logsumexp identity: sum_p (log s + m - x[target])
            ce_plane = jnp.where(valid, jnp.log(s) + m, 0.0)

            for c in range(C):
                is_c = tgt == c
                p_c = ezs[c] * inv_s                                   # masked prob
                acc_ref[c] += fold(jnp.where(is_c, p_c, 0.0))          # intersection
                acc_ref[C + c] += fold(p_c)                            # prob sum
                acc_ref[2 * C + c] += fold(is_c.astype(jnp.float32))   # target sum
                ce_plane = ce_plane - jnp.where(is_c, xs[c], 0.0)
            acc_ref[3 * C] += fold(ce_plane)

        def run(masked):
            if n_sub == 1:
                subtile(0, masked)
            else:
                def body(i, carry):
                    subtile(i, masked)
                    return carry
                lax.fori_loop(0, n_sub, body, 0)

        if ragged:
            last = pl.num_programs(1) - 1

            @pl.when(k != last)
            def _full_chunks():
                run(False)

            @pl.when(k == last)
            def _tail_chunk():
                run(True)
        else:
            run(False)

        @pl.when(k == pl.num_programs(1) - 1)
        def _finish():
            # single cross-sublane reduce per sample; lane reduce happens in JAX
            out_ref[0] = jnp.sum(acc_ref[...], axis=1)

    return kernel, nstat


def nc_branch_loss(nc_logits, nc_targets):
    """JAX/Pallas equivalent of _NCBranchLoss.forward."""
    N, C, H, W = nc_logits.shape
    assert C in (2, 5)
    P = H * W

    # targets: (N,1,H,W) or (N,H,W) -> (N, P); keep narrow integer dtypes.
    assert nc_targets.size == N * P
    tgt = nc_targets.reshape(N, P)
    tdt = np.dtype(tgt.dtype)
    if tdt == np.dtype(np.uint8):
        tgt = tgt.astype(jnp.int8)          # class ids 0..4; lets -1 padding work
    elif tdt not in (np.dtype(np.int8), np.dtype(np.int32)):
        tgt = tgt.astype(jnp.int32)

    # keep bf16 logits as bf16 for the HBM->VMEM DMA; compute in f32 in-kernel
    ldt = np.dtype(nc_logits.dtype)
    if ldt == np.dtype(jnp.bfloat16) or ldt == np.dtype(np.float32):
        logits = nc_logits
    else:
        logits = nc_logits.astype(jnp.float32)
    logits = logits.reshape(N, C, P)

    # Pixel-dense rows of 128 lanes.  Only align rows to the 8-sublane tile
    # (1024 pixels); for typical image sizes this is a pure reshape with no
    # padding copy.  The chunk grid uses cdiv(rows, r_chunk) and the ragged
    # last chunk is masked in-kernel, so we never pad up to a chunk multiple.
    rows = -(-P // LANE)
    rows_a = _round_up(max(rows, SUB), SUB)
    p_pad = rows_a * LANE
    if p_pad != P:
        logits = jnp.pad(logits, ((0, 0), (0, 0), (0, p_pad - P)))
        tgt = jnp.pad(tgt, ((0, 0), (0, p_pad - P)), constant_values=-1)
    logits = logits.reshape(N, C, rows_a, LANE)
    tgt = tgt.reshape(N, rows_a, LANE)

    # Chunk sizing: ~8 MiB of logits per grid step on 128 MiB-VMEM parts
    # (v5e/v6e), ~4 MiB on 64 MiB parts (v7x).  Compute iterates SUBROWS
    # sub-tiles inside the kernel so f32 intermediates don't scale with the
    # DMA tile (keeps double-buffer headroom on v7x).
    vmem_cap = _tpu_vmem_bytes()
    big_vmem = vmem_cap >= 96 * 1024 * 1024
    target_chunk = (8 if big_vmem else 4) * 1024 * 1024
    vmem_limit = (96 if big_vmem else 48) * 1024 * 1024

    itemsize = jnp.dtype(logits.dtype).itemsize
    rows_budget = max(SUBROWS,
                      (target_chunk // (C * LANE * itemsize)) // SUBROWS * SUBROWS)
    if rows_a <= SUBROWS:
        subrows = rows_a
        n_sub = 1
        r_chunk = rows_a                    # full-dim block (always layout-legal)
    else:
        subrows = SUBROWS
        n_sub = min(rows_budget, rows_a) // SUBROWS
        r_chunk = n_sub * SUBROWS
    num_chunks = -(-rows_a // r_chunk)
    ragged = (rows_a % r_chunk) != 0

    kernel, nstat = _make_kernel(C, r_chunk, subrows, n_sub, rows_a, ragged)

    stats = pl.pallas_call(
        kernel,
        out_shape=jax.ShapeDtypeStruct((N, nstat, LANE), jnp.float32),
        grid_spec=pltpu.PrefetchScalarGridSpec(
            num_scalar_prefetch=0,
            grid=(N, num_chunks),
            in_specs=[
                pl.BlockSpec((1, C, r_chunk, LANE), lambda n, k: (n, 0, k, 0)),
                pl.BlockSpec((1, r_chunk, LANE), lambda n, k: (n, k, 0)),
            ],
            out_specs=pl.BlockSpec((1, nstat, LANE), lambda n, k: (n, 0, 0)),
            scratch_shapes=[pltpu.VMEM((nstat, SUB, LANE), jnp.float32)],
        ),
        compiler_params=pltpu.CompilerParams(
            # batch axis has no cross-sample carry -> shardable across cores
            dimension_semantics=("parallel", "arbitrary"),
            vmem_limit_bytes=vmem_limit,
        ),
    )(logits, tgt)

    # tiny final combine in plain JAX
    sums = jnp.sum(stats, axis=-1)                 # (N, 3C+1)
    inter = sums[:, 0:C]
    psum = sums[:, C:2 * C]
    tsum = sums[:, 2 * C:3 * C]
    ce_sum = sums[:, 3 * C]

    dice = (2.0 * inter + SMOOTH) / (psum + tsum + SMOOTH)   # (N, C)
    dice_loss = jnp.mean(1.0 - jnp.mean(dice, axis=0))       # DiceCoeff
    ce_loss = jnp.sum(ce_sum) / (N * P)                      # NLLLoss(mean)
    return ce_loss + dice_loss


def _reference(nc_logits, nc_targets):
    """Pure-JAX reference reproducing the PyTorch semantics."""
    N, C, H, W = nc_logits.shape
    tgt = nc_targets.reshape(N, H, W)
    x = nc_logits.astype(jnp.float32)
    logp = jax.nn.log_softmax(x, axis=1)
    probs = jax.nn.softmax(x, axis=1)
    onehot = jax.nn.one_hot(tgt, C, axis=1, dtype=jnp.float32)
    ce = -jnp.mean(jnp.sum(onehot * logp, axis=1))
    pf = probs.reshape(N, C, -1)
    tf = onehot.reshape(N, C, -1)
    inter = jnp.sum(pf * tf, axis=-1)
    ps = jnp.sum(pf, axis=-1)
    ts = jnp.sum(tf, axis=-1)
    dice = (2.0 * inter + SMOOTH) / (ps + ts + SMOOTH)       # (N, C)
    dice_loss = jnp.mean(1.0 - jnp.mean(dice, axis=0))
    return ce + dice_loss


if __name__ == "__main__":
    key = jax.random.PRNGKey(0)
    k1, k2 = jax.random.split(key)

    N, C, H, W = 2, 2, 16, 16          # C must be in (2, 5) per DiceCoeff
    nc_logits = jax.random.normal(k1, (N, C, H, W), dtype=jnp.float32)
    nc_targets = jax.random.randint(k2, (N, 1, H, W), 0, C, dtype=jnp.int32)

    out = nc_branch_loss(nc_logits, nc_targets)
    out = jax.block_until_ready(out)

    ref = _reference(nc_logits, nc_targets)
    # approx EUP reciprocal (~2^-12 rel err on dice probs) -> slightly looser tol
    assert jnp.allclose(out, ref, rtol=2e-3, atol=2e-3), (out, ref)

    print("KERNEL_OK")
</pallas_src>

<mosaic_0001>
module attributes {stable_mosaic.version = 11 : i64} {
  func.func @kernel(%arg0: i32, %arg1: i32, %arg2: memref<1x2x8x128xf32, #tpu.memory_space<vmem>>, %arg3: memref<1x8x128xi32, #tpu.memory_space<vmem>>, %arg4: memref<1x7x128xf32, #tpu.memory_space<vmem>>, %arg5: memref<7x8x128xf32, #tpu.memory_space<vmem>>) attributes {dimension_semantics = [#tpu.dimension_semantics<parallel>, #tpu.dimension_semantics<arbitrary>], iteration_bounds = array<i64: 2, 1>, scalar_prefetch = 0 : i64, scratch_operands = 1 : i64, tpu.core_type = #tpu.core_type<tc>, window_params = [{transform_indices = @transform_0, window_bounds = array<i64: 1, 2, 8, 128>}, {transform_indices = @transform_1, window_bounds = array<i64: 1, 8, 128>}, {transform_indices = @transform_2, window_bounds = array<i64: 1, 7, 128>}]} {
    %c0_i32 = arith.constant 0 : i32
    %0 = arith.cmpi eq, %arg1, %c0_i32 : i32
    %1 = arith.extui %0 : i1 to i32
    %c0_i32_0 = arith.constant 0 : i32
    %2 = arith.cmpi ne, %1, %c0_i32_0 : i32
    scf.if %2 {
      %cst_63 = arith.constant 0.000000e+00 : f32
      %103 = vector.broadcast %cst_63 : f32 to vector<7x8x128xf32>
      %c0_64 = arith.constant 0 : index
      %c0_65 = arith.constant 0 : index
      %c0_66 = arith.constant 0 : index
      %104 = vector.load %arg5[%c0_64, %c0_65, %c0_66] : memref<7x8x128xf32, #tpu.memory_space<vmem>>, vector<7x8x128xf32>
      tpu.vector_store %arg5[%c0_64, %c0_65, %c0_66], %103 {strides = array<i32>} : memref<7x8x128xf32, #tpu.memory_space<vmem>>, vector<7x8x128xf32>,
    } else {
    }
    %c0 = arith.constant 0 : index
    %c0_1 = arith.constant 0 : index
    %c0_2 = arith.constant 0 : index
    %3 = vector.load %arg3[%c0, %c0_1, %c0_2] : memref<1x8x128xi32, #tpu.memory_space<vmem>>, vector<1x8x128xi32>
    %4 = vector.shape_cast %3 : vector<1x8x128xi32> to vector<8x128xi32>
    %c0_3 = arith.constant 0 : index
    %c0_4 = arith.constant 0 : index
    %c0_5 = arith.constant 0 : index
    %c0_6 = arith.constant 0 : index
    %5 = vector.load %arg2[%c0_3, %c0_4, %c0_5, %c0_6] : memref<1x2x8x128xf32, #tpu.memory_space<vmem>>, vector<1x1x8x128xf32>
    %6 = vector.shape_cast %5 : vector<1x1x8x128xf32> to vector<8x128xf32>
    %c0_7 = arith.constant 0 : index
    %c1 = arith.constant 1 : index
    %c0_8 = arith.constant 0 : index
    %c0_9 = arith.constant 0 : index
    %7 = vector.load %arg2[%c0_7, %c1, %c0_8, %c0_9] : memref<1x2x8x128xf32, #tpu.memory_space<vmem>>, vector<1x1x8x128xf32>
    %8 = vector.shape_cast %7 : vector<1x1x8x128xf32> to vector<8x128xf32>
    %c0_i32_10 = arith.constant 0 : i32
    %9 = vector.broadcast %c0_i32_10 : i32 to vector<8x128xi32>
    %10 = arith.cmpi sge, %4, %9 : vector<8x128xi32>
    %11 = arith.maximumf %6, %8 : vector<8x128xf32>
    %12 = arith.subf %6, %11 : vector<8x128xf32>
    %13 = math.exp %12 : vector<8x128xf32>
    %14 = arith.subf %8, %11 : vector<8x128xf32>
    %15 = math.exp %14 : vector<8x128xf32>
    %16 = arith.addf %13, %15 : vector<8x128xf32>
    %17 = tpu.reciprocal %16 {approx = true} : vector<8x128xf32> -> vector<8x128xf32>
    %cst = arith.constant 0.000000e+00 : f32
    %18 = vector.broadcast %cst : f32 to vector<8x128xf32>
    %19 = arith.select %10, %17, %18 : vector<8x128xi1>, vector<8x128xf32>
    %20 = math.log %16 : vector<8x128xf32>
    %21 = arith.addf %20, %11 : vector<8x128xf32>
    %cst_11 = arith.constant 0.000000e+00 : f32
    %22 = vector.broadcast %cst_11 : f32 to vector<8x128xf32>
    %23 = arith.select %10, %21, %22 : vector<8x128xi1>, vector<8x128xf32>
    %c0_i32_12 = arith.constant 0 : i32
    %24 = vector.broadcast %c0_i32_12 : i32 to vector<8x128xi32>
    %25 = arith.cmpi eq, %4, %24 : vector<8x128xi32>
    %26 = arith.mulf %13, %19 : vector<8x128xf32>
    %c0_13 = arith.constant 0 : index
    %c0_14 = arith.constant 0 : index
    %c0_15 = arith.constant 0 : index
    %27 = vector.load %arg5[%c0_13, %c0_14, %c0_15] : memref<7x8x128xf32, #tpu.memory_space<vmem>>, vector<1x8x128xf32>
    %28 = vector.shape_cast %27 : vector<1x8x128xf32> to vector<8x128xf32>
    %cst_16 = arith.constant 0.000000e+00 : f32
    %29 = vector.broadcast %cst_16 : f32 to vector<8x128xf32>
    %30 = arith.select %25, %26, %29 : vector<8x128xi1>, vector<8x128xf32>
    %31 = vector.shape_cast %30 : vector<8x128xf32> to vector<1x8x128xf32>
    %cst_17 = arith.constant dense<0.000000e+00> : vector<8x128xf32>
    %32 = vector.multi_reduction <add>, %31, %cst_17 [0] : vector<1x8x128xf32> to vector<8x128xf32>
    %33 = arith.addf %28, %32 : vector<8x128xf32>
    %c0_18 = arith.constant 0 : index
    %c0_19 = arith.constant 0 : index
    %c0_20 = arith.constant 0 : index
    %34 = vector.load %arg5[%c0_18, %c0_19, %c0_20] : memref<7x8x128xf32, #tpu.memory_space<vmem>>, vector<1x8x128xf32>
    %35 = vector.shape_cast %34 : vector<1x8x128xf32> to vector<8x128xf32>
    %36 = vector.shape_cast %33 : vector<8x128xf32> to vector<1x8x128xf32>
    tpu.vector_store %arg5[%c0_18, %c0_19, %c0_20], %36 {strides = array<i32>} : memref<7x8x128xf32, #tpu.memory_space<vmem>>, vector<1x8x128xf32>,
    %c2 = arith.constant 2 : index
    %c0_21 = arith.constant 0 : index
    %c0_22 = arith.constant 0 : index
    %37 = vector.load %arg5[%c2, %c0_21, %c0_22] : memref<7x8x128xf32, #tpu.memory_space<vmem>>, vector<1x8x128xf32>
    %38 = vector.shape_cast %37 : vector<1x8x128xf32> to vector<8x128xf32>
    %39 = vector.shape_cast %26 : vector<8x128xf32> to vector<1x8x128xf32>
    %cst_23 = arith.constant dense<0.000000e+00> : vector<8x128xf32>
    %40 = vector.multi_reduction <add>, %39, %cst_23 [0] : vector<1x8x128xf32> to vector<8x128xf32>
    %41 = arith.addf %38, %40 : vector<8x128xf32>
    %c2_24 = arith.constant 2 : index
    %c0_25 = arith.constant 0 : index
    %c0_26 = arith.constant 0 : index
    %42 = vector.load %arg5[%c2_24, %c0_25, %c0_26] : memref<7x8x128xf32, #tpu.memory_space<vmem>>, vector<1x8x128xf32>
    %43 = vector.shape_cast %42 : vector<1x8x128xf32> to vector<8x128xf32>
    %44 = vector.shape_cast %41 : vector<8x128xf32> to vector<1x8x128xf32>
    tpu.vector_store %arg5[%c2_24, %c0_25, %c0_26], %44 {strides = array<i32>} : memref<7x8x128xf32, #tpu.memory_space<vmem>>, vector<1x8x128xf32>,
    %c4 = arith.constant 4 : index
    %c0_27 = arith.constant 0 : index
    %c0_28 = arith.constant 0 : index
    %45 = vector.load %arg5[%c4, %c0_27, %c0_28] : memref<7x8x128xf32, #tpu.memory_space<vmem>>, vector<1x8x128xf32>
    %46 = vector.shape_cast %45 : vector<1x8x128xf32> to vector<8x128xf32>
    %47 = arith.extui %25 : vector<8x128xi1> to vector<8x128xi32>
    %48 = arith.sitofp %47 : vector<8x128xi32> to vector<8x128xf32>
    %49 = vector.shape_cast %48 : vector<8x128xf32> to vector<1x8x128xf32>
    %cst_29 = arith.constant dense<0.000000e+00> : vector<8x128xf32>
    %50 = vector.multi_reduction <add>, %49, %cst_29 [0] : vector<1x8x128xf32> to vector<8x128xf32>
    %51 = arith.addf %46, %50 : vector<8x128xf32>
    %c4_30 = arith.constant 4 : index
    %c0_31 = arith.constant 0 : index
    %c0_32 = arith.constant 0 : index
    %52 = vector.load %arg5[%c4_30, %c0_31, %c0_32] : memref<7x8x128xf32, #tpu.memory_space<vmem>>, vector<1x8x128xf32>
    %53 = vector.shape_cast %52 : vector<1x8x128xf32> to vector<8x128xf32>
    %54 = vector.shape_cast %51 : vector<8x128xf32> to vector<1x8x128xf32>
    tpu.vector_store %arg5[%c4_30, %c0_31, %c0_32], %54 {strides = array<i32>} : memref<7x8x128xf32, #tpu.memory_space<vmem>>, vector<1x8x128xf32>,
    %cst_33 = arith.constant 0.000000e+00 : f32
    %55 = vector.broadcast %cst_33 : f32 to vector<8x128xf32>
    %56 = arith.select %25, %6, %55 : vector<8x128xi1>, vector<8x128xf32>
    %57 = arith.subf %23, %56 : vector<8x128xf32>
    %c1_i32 = arith.constant 1 : i32
    %58 = vector.broadcast %c1_i32 : i32 to vector<8x128xi32>
    %59 = arith.cmpi eq, %4, %58 : vector<8x128xi32>
    %60 = arith.mulf %15, %19 : vector<8x128xf32>
    %c1_34 = arith.constant 1 : index
    %c0_35 = arith.constant 0 : index
    %c0_36 = arith.constant 0 : index
    %61 = vector.load %arg5[%c1_34, %c0_35, %c0_36] : memref<7x8x128xf32, #tpu.memory_space<vmem>>, vector<1x8x128xf32>
    %62 = vector.shape_cast %61 : vector<1x8x128xf32> to vector<8x128xf32>
    %cst_37 = arith.constant 0.000000e+00 : f32
    %63 = vector.broadcast %cst_37 : f32 to vector<8x128xf32>
    %64 = arith.select %59, %60, %63 : vector<8x128xi1>, vector<8x128xf32>
    %65 = vector.shape_cast %64 : vector<8x128xf32> to vector<1x8x128xf32>
    %cst_38 = arith.constant dense<0.000000e+00> : vector<8x128xf32>
    %66 = vector.multi_reduction <add>, %65, %cst_38 [0] : vector<1x8x128xf32> to vector<8x128xf32>
    %67 = arith.addf %62, %66 : vector<8x128xf32>
    %c1_39 = arith.constant 1 : index
    %c0_40 = arith.constant 0 : index
    %c0_41 = arith.constant 0 : index
    %68 = vector.load %arg5[%c1_39, %c0_40, %c0_41] : memref<7x8x128xf32, #tpu.memory_space<vmem>>, vector<1x8x128xf32>
    %69 = vector.shape_cast %68 : vector<1x8x128xf32> to vector<8x128xf32>
    %70 = vector.shape_cast %67 : vector<8x128xf32> to vector<1x8x128xf32>
    tpu.vector_store %arg5[%c1_39, %c0_40, %c0_41], %70 {strides = array<i32>} : memref<7x8x128xf32, #tpu.memory_space<vmem>>, vector<1x8x128xf32>,
    %c3 = arith.constant 3 : index
    %c0_42 = arith.constant 0 : index
    %c0_43 = arith.constant 0 : index
    %71 = vector.load %arg5[%c3, %c0_42, %c0_43] : memref<7x8x128xf32, #tpu.memory_space<vmem>>, vector<1x8x128xf32>
    %72 = vector.shape_cast %71 : vector<1x8x128xf32> to vector<8x128xf32>
    %73 = vector.shape_cast %60 : vector<8x128xf32> to vector<1x8x128xf32>
    %cst_44 = arith.constant dense<0.000000e+00> : vector<8x128xf32>
    %74 = vector.multi_reduction <add>, %73, %cst_44 [0] : vector<1x8x128xf32> to vector<8x128xf32>
    %75 = arith.addf %72, %74 : vector<8x128xf32>
    %c3_45 = arith.constant 3 : index
    %c0_46 = arith.constant 0 : index
    %c0_47 = arith.constant 0 : index
    %76 = vector.load %arg5[%c3_45, %c0_46, %c0_47] : memref<7x8x128xf32, #tpu.memory_space<vmem>>, vector<1x8x128xf32>
    %77 = vector.shape_cast %76 : vector<1x8x128xf32> to vector<8x128xf32>
    %78 = vector.shape_cast %75 : vector<8x128xf32> to vector<1x8x128xf32>
    tpu.vector_store %arg5[%c3_45, %c0_46, %c0_47], %78 {strides = array<i32>} : memref<7x8x128xf32, #tpu.memory_space<vmem>>, vector<1x8x128xf32>,
    %c5 = arith.constant 5 : index
    %c0_48 = arith.constant 0 : index
    %c0_49 = arith.constant 0 : index
    %79 = vector.load %arg5[%c5, %c0_48, %c0_49] : memref<7x8x128xf32, #tpu.memory_space<vmem>>, vector<1x8x128xf32>
    %80 = vector.shape_cast %79 : vector<1x8x128xf32> to vector<8x128xf32>
    %81 = arith.extui %59 : vector<8x128xi1> to vector<8x128xi32>
    %82 = arith.sitofp %81 : vector<8x128xi32> to vector<8x128xf32>
    %83 = vector.shape_cast %82 : vector<8x128xf32> to vector<1x8x128xf32>
    %cst_50 = arith.constant dense<0.000000e+00> : vector<8x128xf32>
    %84 = vector.multi_reduction <add>, %83, %cst_50 [0] : vector<1x8x128xf32> to vector<8x128xf32>
    %85 = arith.addf %80, %84 : vector<8x128xf32>
    %c5_51 = arith.constant 5 : index
    %c0_52 = arith.constant 0 : index
    %c0_53 = arith.constant 0 : index
    %86 = vector.load %arg5[%c5_51, %c0_52, %c0_53] : memref<7x8x128xf32, #tpu.memory_space<vmem>>, vector<1x8x128xf32>
    %87 = vector.shape_cast %86 : vector<1x8x128xf32> to vector<8x128xf32>
    %88 = vector.shape_cast %85 : vector<8x128xf32> to vector<1x8x128xf32>
    tpu.vector_store %arg5[%c5_51, %c0_52, %c0_53], %88 {strides = array<i32>} : memref<7x8x128xf32, #tpu.memory_space<vmem>>, vector<1x8x128xf32>,
    %cst_54 = arith.constant 0.000000e+00 : f32
    %89 = vector.broadcast %cst_54 : f32 to vector<8x128xf32>
    %90 = arith.select %59, %8, %89 : vector<8x128xi1>, vector<8x128xf32>
    %91 = arith.subf %57, %90 : vector<8x128xf32>
    %c6 = arith.constant 6 : index
    %c0_55 = arith.constant 0 : index
    %c0_56 = arith.constant 0 : index
    %92 = vector.load %arg5[%c6, %c0_55, %c0_56] : memref<7x8x128xf32, #tpu.memory_space<vmem>>, vector<1x8x128xf32>
    %93 = vector.shape_cast %92 : vector<1x8x128xf32> to vector<8x128xf32>
    %94 = vector.shape_cast %91 : vector<8x128xf32> to vector<1x8x128xf32>
    %cst_57 = arith.constant dense<0.000000e+00> : vector<8x128xf32>
    %95 = vector.multi_reduction <add>, %94, %cst_57 [0] : vector<1x8x128xf32> to vector<8x128xf32>
    %96 = arith.addf %93, %95 : vector<8x128xf32>
    %c6_58 = arith.constant 6 : index
    %c0_59 = arith.constant 0 : index
    %c0_60 = arith.constant 0 : index
    %97 = vector.load %arg5[%c6_58, %c0_59, %c0_60] : memref<7x8x128xf32, #tpu.memory_space<vmem>>, vector<1x8x128xf32>
    %98 = vector.shape_cast %97 : vector<1x8x128xf32> to vector<8x128xf32>
    %99 = vector.shape_cast %96 : vector<8x128xf32> to vector<1x8x128xf32>
    tpu.vector_store %arg5[%c6_58, %c0_59, %c0_60], %99 {strides = array<i32>} : memref<7x8x128xf32, #tpu.memory_space<vmem>>, vector<1x8x128xf32>,
    %c0_i32_61 = arith.constant 0 : i32
    %100 = arith.cmpi eq, %arg1, %c0_i32_61 : i32
    %101 = arith.extui %100 : i1 to i32
    %c0_i32_62 = arith.constant 0 : i32
    %102 = arith.cmpi ne, %101, %c0_i32_62 : i32
    scf.if %102 {
      %c0_63 = arith.constant 0 : index
      %c0_64 = arith.constant 0 : index
      %c0_65 = arith.constant 0 : index
      %103 = vector.load %arg5[%c0_63, %c0_64, %c0_65] : memref<7x8x128xf32, #tpu.memory_space<vmem>>, vector<7x8x128xf32>
      %cst_66 = arith.constant dense<0.000000e+00> : vector<7x128xf32>
      %104 = vector.multi_reduction <add>, %103, %cst_66 [1] : vector<7x8x128xf32> to vector<7x128xf32>
      %c0_67 = arith.constant 0 : index
      %c0_68 = arith.constant 0 : index
      %c0_69 = arith.constant 0 : index
      %105 = vector.load %arg4[%c0_67, %c0_68, %c0_69] : memref<1x7x128xf32, #tpu.memory_space<vmem>>, vector<1x7x128xf32>
      %106 = vector.shape_cast %105 : vector<1x7x128xf32> to vector<7x128xf32>
      %107 = vector.shape_cast %104 : vector<7x128xf32> to vector<1x7x128xf32>
      tpu.vector_store %arg4[%c0_67, %c0_68, %c0_69], %107 {strides = array<i32>} : memref<1x7x128xf32, #tpu.memory_space<vmem>>, vector<1x7x128xf32>,
    } else {
    }
    return
  }
  func.func @transform_0(%arg0: i32, %arg1: i32) -> (i32, i32, i32, i32) {
    %c0_i32 = arith.constant 0 : i32
    %c0_i32_0 = arith.constant 0 : i32
    %c0_i32_1 = arith.constant 0 : i32
    return %arg0, %c0_i32, %arg1, %c0_i32_0 : i32, i32, i32, i32
  }
  func.func @transform_1(%arg0: i32, %arg1: i32) -> (i32, i32, i32) {
    %c0_i32 = arith.constant 0 : i32
    %c0_i32_0 = arith.constant 0 : i32
    return %arg0, %arg1, %c0_i32 : i32, i32, i32
  }
  func.func @transform_2(%arg0: i32, %arg1: i32) -> (i32, i32, i32) {
    %c0_i32 = arith.constant 0 : i32
    %c0_i32_0 = arith.constant 0 : i32
    %c0_i32_1 = arith.constant 0 : i32
    return %arg0, %c0_i32, %c0_i32_0 : i32, i32, i32
  }
}

</mosaic_0001>

<llo_original>
// kernel: tpu_custom_call.1
$region0: #{tpu_custom_call.1}
  #allocation0 [shape = 'u32[]', space=smem, size = 0x4, offset = 0x4, fixed_abs, tag = 'smem constant byte address 0x4 - core index']
  #allocation1 [shape = 'u32[144,128]{1,0:T(1,128)}', space=vmem, size = 0x12000, scoped, tag = 'internal scratch']
  #allocation2 [shape = 'f32[7,8,128]{2,1,0:T(8,128)}', space=vmem, size = 0x7000, scoped, tag = 'scratch operand']
  %s0 = inlined_call_operand.hbm [shape: f32[2,2,8,128], index: 0, kind: input, shape index: {}]
  %s1 = inlined_call_operand.hbm [shape: s32[2,8,128], index: 1, kind: input, shape index: {}]
  %s2 = inlined_call_operand.vmem [shape: f32[2,7,128], index: 2, kind: output, shape index: {}]
  %s3 = sld [smem:[#allocation0]]
  $region57: #{tpu_custom_call.1} parent=0
    _
  %s5 = ssub.s32 1, %s3
  %s6 = scalar_select 0, %s5, %s3
  $region1: #{tpu_custom_call.1} parent=0
    #allocation3 [shape = 'u8[16384]{0}', space=vmem, size = 0x4000, scoped, tag = 'input window, operand 0']
    #allocation4 [shape = 's32[2]{0}', space=sflag, size = 0x8, scoped, tag = 'scoped memory for tpu_custom_call.1']
    #allocation5 [shape = 'u8[8192]{0}', space=vmem, size = 0x2000, scoped, tag = 'input window, operand 1']
    #allocation6 [shape = 's32[2]{0}', space=sflag, size = 0x8, scoped, tag = 'scoped memory for tpu_custom_call.1']
    %7 = vsyncpa [#allocation4], 0
    %s8 = scalar_lea.sflag [#allocation4], 1
    %9 = vsyncpa %s8, 0
    %10 = vsyncpa [#allocation6], 0
    %s11 = scalar_lea.sflag [#allocation6], 1
    %12 = vsyncpa %s11, 0
    loop: start=0, step=1, limit=4
    $region2: #{tpu_custom_call.1} parent=1 // loop_pre_header
      _
    $region3: #{tpu_custom_call.1} parent=1 // loop_header
      %s14 = sphi 0, %s18
      %p15 = scmp.ge.s32.totalorder %s14, 4
      %s21 = sphi 0, %s33
      %s22 = sphi 0, %s29
      %s23 = sphi 0, %s21
      %s24 = sphi 0, %s22
      %s25 = sphi 0, %s23
      %s26 = sphi 0, %s24
      %s38 = sphi 0, %s40
      %s41 = sphi 0, %s38
      %s42 = sphi 0, %s41
      %s58 = sphi 0, %s42
      %s66 = sphi 0, %s68
      %s69 = sphi 0, %s66
      %s70 = sphi 0, %s69
      %s86 = sphi 0, %s70
      %s92 = sphi 0, %s94
      %s95 = sphi 0, %s92
      %s96 = sphi 0, %s95
      %s112 = sphi 0, %s96
    $region4: #{tpu_custom_call.1} parent=1 // loop_header_branch
      %17 = sbr.rel (%p15) target = $region8
    $region5: #{tpu_custom_call.1} parent=1 // loop_body
      %s19 = ssub.s32 %s14, 1
      %s20 = ssub.s32 %s14, 2
      %s27 = sadd.s32 1, %s22
      %p28 = scmp.ge.s32.totalorder %s27, 1
      %s29 = scalar_select %p28, 0, %s27
      %s30 = sadd.s32 1, %s21
      %s31 = scalar_select %p28, %s30, %s21
      %p32 = scmp.ge.s32.totalorder %s31, 2
      %s33 = scalar_select %p32, 0, %s31
      %s34 = ssub.s32 %s21, %s33
      %s35 = ssub.s32 %s22, %s29
      %s36 = sor.u32 %s34, %s35
      %p37 = scmp.eq.s32.totalorder %s36, 0
      %s39 = sadd.s32 %s38, 1
      %s40 = scalar_select %p37, %s38, %s39
      %p43 = pneg %p37
      %p44 = scmp.eq.s32.totalorder %s14, 1
      %p45 = por %p43, %p44
      %p46 = scmp.ne.s32.totalorder %s38, %s41
      %p47 = scmp.eq.s32.totalorder %s14, 0
      %p48 = por %p46, %p47
      %p49 = scmp.ne.s32.totalorder %s38, %s41
      %p50 = scmp.eq.s32.totalorder %s19, 1
      %p51 = por %p49, %p50
      %p52 = scmp.ne.s32.totalorder %s41, %s42
      %p53 = scmp.eq.s32.totalorder %s19, 0
      %p54 = por %p52, %p53
      %p55 = scmp.ne.s32.totalorder %s41, %s42
      %p56 = scmp.eq.s32.totalorder %s20, 1
      %p57 = por %p55, %p56
      %p59 = scmp.ne.s32.totalorder %s42, %s58
      %p60 = scmp.eq.s32.totalorder %s20, 0
      %p61 = por %p59, %p60
      %s62 = ssub.s32 %s21, %s33
      %s63 = ssub.s32 %s22, %s29
      %s64 = sor.u32 %s62, %s63
      %p65 = scmp.eq.s32.totalorder %s64, 0
      %s67 = sadd.s32 %s66, 1
      %s68 = scalar_select %p65, %s66, %s67
      %p71 = pneg %p65
      %p72 = scmp.eq.s32.totalorder %s14, 1
      %p73 = por %p71, %p72
      %p74 = scmp.ne.s32.totalorder %s66, %s69
      %p75 = scmp.eq.s32.totalorder %s14, 0
      %p76 = por %p74, %p75
      %p77 = scmp.ne.s32.totalorder %s66, %s69
      %p78 = scmp.eq.s32.totalorder %s19, 1
      %p79 = por %p77, %p78
      %p80 = scmp.ne.s32.totalorder %s69, %s70
      %p81 = scmp.eq.s32.totalorder %s19, 0
      %p82 = por %p80, %p81
      %p83 = scmp.ne.s32.totalorder %s69, %s70
      %p84 = scmp.eq.s32.totalorder %s20, 1
      %p85 = por %p83, %p84
      %p87 = scmp.ne.s32.totalorder %s70, %s86
      %p88 = scmp.eq.s32.totalorder %s20, 0
      %p89 = por %p87, %p88
      %s90 = ssub.s32 %s21, %s33
      %p91 = scmp.eq.s32.totalorder %s90, 0
      %s93 = sadd.s32 %s92, 1
      %s94 = scalar_select %p91, %s92, %s93
      %p97 = pneg %p91
      %p98 = scmp.eq.s32.totalorder %s14, 1
      %p99 = por %p97, %p98
      %p100 = scmp.ne.s32.totalorder %s92, %s95
      %p101 = scmp.eq.s32.totalorder %s14, 0
      %p102 = por %p100, %p101
      %p103 = scmp.ne.s32.totalorder %s92, %s95
      %p104 = scmp.eq.s32.totalorder %s19, 1
      %p105 = por %p103, %p104
      %p106 = scmp.ne.s32.totalorder %s95, %s96
      %p107 = scmp.eq.s32.totalorder %s19, 0
      %p108 = por %p106, %p107
      %p109 = scmp.ne.s32.totalorder %s95, %s96
      %p110 = scmp.eq.s32.totalorder %s20, 1
      %p111 = por %p109, %p110
      %p113 = scmp.ne.s32.totalorder %s96, %s112
      %p114 = scmp.eq.s32.totalorder %s20, 0
      %p115 = por %p113, %p114
      %p116 = scmp.le.s32.totalorder 1, %s14
      %p117 = scmp.lt.s32.totalorder %s14, 3
      %p118 = pnand %p116, %p117
      %p119 = pneg %p118
      // Predicated region
      $region9: #{tpu_custom_call.1} parent=5 // pred_check
        _
      $region10: #{tpu_custom_call.1} parent=5 // pred_check_branch
        %121 = sbr.rel (%p118) target = $region12
      $region11: #{tpu_custom_call.1} parent=5 // pred_region
        %s122 = ssub.s32 %s14, 1
      $region12: #{tpu_custom_call.1} parent=5 // pred_fallthru
        _
      %p123 = scmp.lt.s32.totalorder %s14, 2
      // Predicated region
      $region13: #{tpu_custom_call.1} parent=5 // pred_check
        %p124 = pneg %p123
      $region14: #{tpu_custom_call.1} parent=5 // pred_check_branch
        %126 = sbr.rel (%p124) target = $region16
      $region15: #{tpu_custom_call.1} parent=5 // pred_region
        // Predicated region
        $region17: #{tpu_custom_call.1} parent=15 // pred_check
          %p127 = pneg %p48
        $region18: #{tpu_custom_call.1} parent=15 // pred_check_branch
          %129 = sbr.rel (%p127) target = $region20
        $region19: #{tpu_custom_call.1} parent=15 // pred_region
          %s130 = sand.u32 %s38, 1
          %s131 = scalar_lea.sflag [#allocation4], %s130
          %s132 = sand.u32 %s38, 1
          %s133 = smul.addr %s132, 16
          %s134 = scalar_lea.vmem [#allocation3], %s133
          %s136 = ssub.s32 256, 256
          %137 = vsyncadd %s131, %s136
          %s138 = smul.addr %s21, 2
          %s139 = sadd.s32 %s22, %s138
          %s140 = smul.addr %s139, 128
          %s141 = scalar_lea.hbm %s0, %s140
          %s142 = sshll.u32 %s134, 4
          %s143 = int_to_ptr.vmem [resolvable:$true] %s142
          %148 = dma.hbm_to_vmem [thread:$0]  %s141, 256, %s143, %s131, 128, 128, 8
        $region20: #{tpu_custom_call.1} parent=15 // pred_fallthru
          _
        // Predicated region
        $region21: #{tpu_custom_call.1} parent=15 // pred_check
          %p149 = pneg %p76
        $region22: #{tpu_custom_call.1} parent=15 // pred_check_branch
          %151 = sbr.rel (%p149) target = $region24
        $region23: #{tpu_custom_call.1} parent=15 // pred_region
          %s152 = sand.u32 %s66, 1
          %s153 = scalar_lea.sflag [#allocation6], %s152
          %s154 = sand.u32 %s66, 1
          %s155 = smul.addr %s154, 8
          %s156 = scalar_lea.vmem [#allocation5], %s155
          %s158 = ssub.s32 128, 128
          %159 = vsyncadd %s153, %s158
          %s160 = sadd.s32 %s22, %s21
          %s161 = smul.addr %s160, 128
          %s162 = scalar_lea.hbm %s1, %s161
          %s164 = sshll.u32 %s156, 4
          %s165 = int_to_ptr.vmem [resolvable:$true] %s164
          %167 = dma.hbm_to_vmem [thread:$0]  %s162, 128, %s165, %s153
        $region24: #{tpu_custom_call.1} parent=15 // pred_fallthru
          _
      $region16: #{tpu_custom_call.1} parent=5 // pred_fallthru
        _
      %p168 = scmp.le.s32.totalorder 1, %s14
      %p169 = scmp.lt.s32.totalorder %s14, 3
      %p170 = pnand %p168, %p169
      %p171 = pneg %p170
      // Predicated region
      $region25: #{tpu_custom_call.1} parent=5 // pred_check
        _
      $region26: #{tpu_custom_call.1} parent=5 // pred_check_branch
        %173 = sbr.rel (%p170) target = $region28
      $region27: #{tpu_custom_call.1} parent=5 // pred_region
        %s174 = ssub.s32 %s14, 1
        %s175 = sand.u32 %s41, 1
        %s176 = scalar_lea.sflag [#allocation4], %s175
        %s177 = sand.u32 %s41, 1
        %s178 = smul.addr %s177, 16
        %s179 = scalar_lea.vmem [#allocation3], %s178
        // Predicated region
        $region29: #{tpu_custom_call.1} parent=27 // pred_check
          %p180 = pneg %p54
        $region30: #{tpu_custom_call.1} parent=27 // pred_check_branch
          %182 = sbr.rel (%p180) target = $region32
        $region31: #{tpu_custom_call.1} parent=27 // pred_region
          %183 = dma.done %s176, 256
        $region32: #{tpu_custom_call.1} parent=27 // pred_fallthru
          _
        %s184 = sand.u32 %s69, 1
        %s185 = scalar_lea.sflag [#allocation6], %s184
        %s186 = sand.u32 %s69, 1
        %s187 = smul.addr %s186, 8
        %s188 = scalar_lea.vmem [#allocation5], %s187
        // Predicated region
        $region33: #{tpu_custom_call.1} parent=27 // pred_check
          %p189 = pneg %p82
        $region34: #{tpu_custom_call.1} parent=27 // pred_check_branch
          %191 = sbr.rel (%p189) target = $region36
        $region35: #{tpu_custom_call.1} parent=27 // pred_region
          %192 = dma.done %s185, 128
        $region36: #{tpu_custom_call.1} parent=27 // pred_fallthru
          _
        %s193 = sand.u32 %s41, 1
        %s194 = scalar_lea.sflag [#allocation4], %s193
        %s195 = sand.u32 %s41, 1
        %s196 = smul.addr %s195, 16
        %s197 = scalar_lea.vmem [#allocation3], %s196
        %p198 = pneg %p54
        %p199 = pneg %p51
        %s200 = sand.u32 %s69, 1
        %s201 = scalar_lea.sflag [#allocation6], %s200
        %s202 = sand.u32 %s69, 1
        %s203 = smul.addr %s202, 8
        %s204 = scalar_lea.vmem [#allocation5], %s203
        %p205 = pneg %p82
        %p206 = pneg %p79
        %p207 = pneg %p108
        %p208 = pneg %p105
        %p209 = scmp.lt.s32.totalorder %s23, 1
        %s210 = scalar_select %p209, %s23, 1
        %s211 = smul.addr %s210, 8
        %s212 = scalar_lea.vmem %s2, %s211
        %p213 = scmp.lt.s32.totalorder %s23, 1
        %s214 = scalar_select %p213, %s23, 1
        %s215 = smul.addr %s214, 8
        %s216 = scalar_lea.vmem %s2, %s215
        %p217 = scmp.eq.s32.totalorder %s24, 0
        // Predicated region
        $region37: #{tpu_custom_call.1} parent=27 // pred_check
          %p218 = pneg %p217
        $region38: #{tpu_custom_call.1} parent=27 // pred_check_branch
          %220 = sbr.rel (%p218) target = $region40
        $region39: #{tpu_custom_call.1} parent=27 // pred_region
          %221 = vst [vmem:[#allocation2] sm:$0xff] 0.0
          %222 = vst [vmem:[#allocation2 + $0x8] sm:$0xff] 0.0
          %223 = vst [vmem:[#allocation2 + $0x10] sm:$0xff] 0.0
          %224 = vst [vmem:[#allocation2 + $0x18] sm:$0xff] 0.0
          %225 = vst [vmem:[#allocation2 + $0x20] sm:$0xff] 0.0
          %226 = vst [vmem:[#allocation2 + $0x28] sm:$0xff] 0.0
          %227 = vst [vmem:[#allocation2 + $0x30] sm:$0xff] 0.0
        $region40: #{tpu_custom_call.1} parent=27 // pred_fallthru
          _
        %v228 = vld [vmem:[%s188] sm:$0xff]
        %v229 = vld [vmem:[%s179] sm:$0xff]
        %s230 = scalar_lea.vmem %s179, 8 [#allocation3]
        %v231 = vld [vmem:[%s230] sm:$0xff]
        %vm232 = vcmp.ge.s32.totalorder %v228, 0
        %v233 = vmax.f32 %v229, %v231
        %v234 = vsub.f32 %v229, %v233
        %v235 = vmul.f32 %v234, 1.442695
        %v236 = vpow.pop %v235
        %v237 = vsub.f32 %v231, %v233
        %v238 = vmul.f32 %v237, 1.442695
        %v239 = vpow.pop %v238
        %v240 = vadd.f32 %v236, %v239
        %v241 = vrcp.pop %v240
        %v242 = vsel %vm232, %v241, 0.0
        %v243 = vlog2.pop %v240
        %v244 = vmul.f32 %v243, 0.6931472
        %v245 = vadd.f32 %v244, %v233
        %v246 = vsel %vm232, %v245, 0.0
        %vm247 = vcmp.eq.s32.totalorder %v228, 0
        %v248 = vmul.f32 %v236, %v242
        %v249 = vld [vmem:[#allocation2] sm:$0xff]
        %v250 = vsel %vm247, %v248, 0.0
        %v251 = vadd.f32 %v250, 0.0
        %v252 = vadd.f32 %v249, %v251
        %253 = vst [vmem:[#allocation2] sm:$0xff] %v252
        %s254 = scalar_lea.vmem [#allocation2], 16
        %v255 = vld [vmem:[%s254] sm:$0xff]
        %v256 = vadd.f32 %v248, 0.0
        %v257 = vadd.f32 %v255, %v256
        %258 = vst [vmem:[%s254] sm:$0xff] %v257
        %s259 = scalar_lea.vmem [#allocation2], 32
        %v260 = vld [vmem:[%s259] sm:$0xff]
        %v261 = vsel %vm247, 1, 0
        %v262 = vcvt.s32.f32 %v261
        %v263 = vadd.f32 %v262, 0.0
        %v264 = vadd.f32 %v260, %v263
        %265 = vst [vmem:[%s259] sm:$0xff] %v264
        %v266 = vsel %vm247, %v229, 0.0
        %v267 = vsub.f32 %v246, %v266
        %vm268 = vcmp.eq.s32.totalorder %v228, 1
        %v269 = vmul.f32 %v239, %v242
        %s270 = scalar_lea.vmem [#allocation2], 8
        %v271 = vld [vmem:[%s270] sm:$0xff]
        %v272 = vsel %vm268, %v269, 0.0
        %v273 = vadd.f32 %v272, 0.0
        %v274 = vadd.f32 %v271, %v273
        %275 = vst [vmem:[%s270] sm:$0xff] %v274
        %s276 = scalar_lea.vmem [#allocation2], 24
        %v277 = vld [vmem:[%s276] sm:$0xff]
        %v278 = vadd.f32 %v269, 0.0
        %v279 = vadd.f32 %v277, %v278
        %280 = vst [vmem:[%s276] sm:$0xff] %v279
        %s281 = scalar_lea.vmem [#allocation2], 40
        %v282 = vld [vmem:[%s281] sm:$0xff]
        %v283 = vsel %vm268, 1, 0
        %v284 = vcvt.s32.f32 %v283
        %v285 = vadd.f32 %v284, 0.0
        %v286 = vadd.f32 %v282, %v285
        %287 = vst [vmem:[%s281] sm:$0xff] %v286
        %v288 = vsel %vm268, %v231, 0.0
        %v289 = vsub.f32 %v267, %v288
        %s290 = scalar_lea.vmem [#allocation2], 48
        %v291 = vld [vmem:[%s290] sm:$0xff]
        %v292 = vadd.f32 %v289, 0.0
        %v293 = vadd.f32 %v291, %v292
        %294 = vst [vmem:[%s290] sm:$0xff] %v293
        // Predicated region
        $region41: #{tpu_custom_call.1} parent=27 // pred_check
          %p295 = pneg %p217
        $region42: #{tpu_custom_call.1} parent=27 // pred_check_branch
          %297 = sbr.rel (%p295) target = $region44
        $region43: #{tpu_custom_call.1} parent=27 // pred_region
          %v298 = vld [vmem:[#allocation2] sm:$0xff]
          %v299 = vld [vmem:[#allocation2 + $0x8] sm:$0xff]
          %v300 = vld [vmem:[#allocation2 + $0x10] sm:$0xff]
          %v301 = vld [vmem:[#allocation2 + $0x18] sm:$0xff]
          %v302 = vld [vmem:[#allocation2 + $0x20] sm:$0xff]
          %v303 = vld [vmem:[#allocation2 + $0x28] sm:$0xff]
          %v304 = vld [vmem:[#allocation2 + $0x30] sm:$0xff]
          %v305 = vrot.slane %v298, 4
          %v306 = vadd.f32 %v298, %v305
          %v307 = vrot.slane %v306, 2
          %v308 = vadd.f32 %v306, %v307
          %v309 = vrot.slane %v308, 1
          %v310 = vadd.f32 %v308, %v309
          %v311 = vrot.slane %v299, 4
          %v312 = vadd.f32 %v299, %v311
          %v313 = vrot.slane %v312, 2
          %v314 = vadd.f32 %v312, %v313
          %v315 = vrot.slane %v314, 1
          %v316 = vadd.f32 %v314, %v315
          %v317 = vrot.slane %v300, 4
          %v318 = vadd.f32 %v300, %v317
          %v319 = vrot.slane %v318, 2
          %v320 = vadd.f32 %v318, %v319
          %v321 = vrot.slane %v320, 1
          %v322 = vadd.f32 %v320, %v321
          %v323 = vrot.slane %v301, 4
          %v324 = vadd.f32 %v301, %v323
          %v325 = vrot.slane %v324, 2
          %v326 = vadd.f32 %v324, %v325
          %v327 = vrot.slane %v326, 1
          %v328 = vadd.f32 %v326, %v327
          %v329 = vrot.slane %v302, 4
          %v330 = vadd.f32 %v302, %v329
          %v331 = vrot.slane %v330, 2
          %v332 = vadd.f32 %v330, %v331
          %v333 = vrot.slane %v332, 1
          %v334 = vadd.f32 %v332, %v333
          %v335 = vrot.slane %v303, 4
          %v336 = vadd.f32 %v303, %v335
          %v337 = vrot.slane %v336, 2
          %v338 = vadd.f32 %v336, %v337
          %v339 = vrot.slane %v338, 1
          %v340 = vadd.f32 %v338, %v339
          %v341 = vrot.slane %v304, 4
          %v342 = vadd.f32 %v304, %v341
          %v343 = vrot.slane %v342, 2
          %v344 = vadd.f32 %v342, %v343
          %v345 = vrot.slane %v344, 1
          %v346 = vadd.f32 %v344, %v345
          %vm354 = vcmask 1041409
          %v355 = vsel %vm354, %v316, %v310
          %vm356 = vcmask 1042434
          %v357 = vsel %vm356, %v322, %v355
          %vm358 = vcmask 1043459
          %v359 = vsel %vm358, %v328, %v357
          %vm360 = vcmask 1044484
          %v361 = vsel %vm360, %v334, %v359
          %vm362 = vcmask 1045509
          %v363 = vsel %vm362, %v340, %v361
          %vm364 = vcmask 1046534
          %v365 = vsel %vm364, %v346, %v363
          %367 = vst [vmem:[%s216] sm:$0x7f] %v365
        $region44: #{tpu_custom_call.1} parent=27 // pred_fallthru
          _
        %p368 = scmp.lt.s32.totalorder %s23, 1
        %s369 = scalar_select %p368, %s23, 1
        %s370 = smul.addr %s369, 8
        %s371 = scalar_lea.vmem %s2, %s370
        // Predicated region
        $region45: #{tpu_custom_call.1} parent=27 // pred_check
          %p372 = pneg %p105
        $region46: #{tpu_custom_call.1} parent=27 // pred_check_branch
          %374 = sbr.rel (%p372) target = $region48
        $region47: #{tpu_custom_call.1} parent=27 // pred_region
          _
        $region48: #{tpu_custom_call.1} parent=27 // pred_fallthru
          _
      $region28: #{tpu_custom_call.1} parent=5 // pred_fallthru
        _
      %p375 = scmp.le.s32.totalorder 2, %s14
      // Predicated region
      $region49: #{tpu_custom_call.1} parent=5 // pred_check
        %p376 = pneg %p375
      $region50: #{tpu_custom_call.1} parent=5 // pred_check_branch
        %378 = sbr.rel (%p376) target = $region52
      $region51: #{tpu_custom_call.1} parent=5 // pred_region
        %s379 = ssub.s32 %s14, 2
        // Predicated region
        $region53: #{tpu_custom_call.1} parent=51 // pred_check
          %p380 = pneg %p111
        $region54: #{tpu_custom_call.1} parent=51 // pred_check_branch
          %382 = sbr.rel (%p380) target = $region56
        $region55: #{tpu_custom_call.1} parent=51 // pred_region
          %p383 = scmp.lt.s32.totalorder %s25, 1
          %s384 = scalar_select %p383, %s25, 1
          %s385 = smul.addr %s384, 8
          %s386 = scalar_lea.vmem %s2, %s385
        $region56: #{tpu_custom_call.1} parent=51 // pred_fallthru
          _
      $region52: #{tpu_custom_call.1} parent=5 // pred_fallthru
        _
    $region6: #{tpu_custom_call.1} parent=1 // loop_footer
      %s18 = sadd.s32 1, %s14
    $region7: #{tpu_custom_call.1} parent=1 // loop_footer_branch
      %13 = sbr.rel target = $region3
    $region8: #{tpu_custom_call.1} parent=1 // loop_exit
      _
    %387 = vsyncpa [#allocation4], 1
    %s388 = scalar_lea.sflag [#allocation4], 1
    %389 = vsyncpa %s388, 1
    %390 = vsyncpa [#allocation6], 1
    %s391 = scalar_lea.sflag [#allocation6], 1
    %392 = vsyncpa %s391, 1

</llo_original>
